<compile_context>
chip_gen: v5e
topology: v5e:2x2
jax: 0.10.0
libtpu: 0.0.40
codegen_flags: <defaults>
</compile_context>

<pallas_src>
import functools

import jax
import jax.numpy as jnp
from jax.experimental import pallas as pl
from jax.experimental.pallas import tpu as pltpu

# Hidden sizes from the PyTorch module.
HIDDEN = (100, 50, 25, 15, 8)

# Max batch-tile rows per grid step (multiple of 8).
_MAX_TB = 512


def _round_up(n, m):
    return ((n + m - 1) // m) * m


def _dqn_kernel(x_ref,
                w1_ref, b1_ref, w2_ref, b2_ref, w3_ref, b3_ref,
                w4_ref, b4_ref, w5_ref, b5_ref, w6_ref, b6_ref,
                o_ref):
    """One (TB, inputs) batch tile through the full 6-layer MLP.

    All weights/biases (~40 KB total) are VMEM-resident across the whole grid;
    only the x/out tiles stream through the pipeline.
    """
    x = x_ref[...]

    def linear(h, w_ref, b_ref):
        # b_ref is (1, N): broadcasts along sublanes with no layout plumbing.
        return jnp.dot(h, w_ref[...],
                       preferred_element_type=jnp.float32) + b_ref[...]

    h = jnp.maximum(linear(x, w1_ref, b1_ref), 0.0)
    h = jnp.maximum(linear(h, w2_ref, b2_ref), 0.0)
    h = jnp.maximum(linear(h, w3_ref, b3_ref), 0.0)
    h = jnp.maximum(linear(h, w4_ref, b4_ref), 0.0)
    h = jnp.maximum(linear(h, w5_ref, b5_ref), 0.0)
    h = linear(h, w6_ref, b6_ref)          # no ReLU after fc6
    o_ref[...] = h.astype(o_ref.dtype)


@jax.jit
def dqn_forward(x, params):
    """x: [B, inputs] float32; params: flat tuple (w1,b1,...,w6,b6).

    Weights are [in, out]; biases are [1, out].
    """
    batch, inputs = x.shape
    outputs = params[-2].shape[1]

    # Batch tile: big enough to amortize per-step overhead, but never larger
    # than the (8-aligned) batch itself.
    tb = min(_MAX_TB, _round_up(batch, 8))
    b_pad = _round_up(batch, tb)
    if b_pad != batch:
        x = jnp.pad(x, ((0, b_pad - batch), (0, 0)))

    grid = (b_pad // tb,)

    # x / out stream through the pipeline (double-buffered per grid step);
    # every weight/bias uses a constant index_map -> resident in VMEM.
    x_spec = pl.BlockSpec((tb, inputs), lambda i: (i, 0))
    const_spec = lambda a: pl.BlockSpec(a.shape, lambda i: (0, 0))
    in_specs = [x_spec] + [const_spec(p) for p in params]
    out_spec = pl.BlockSpec((tb, outputs), lambda i: (i, 0))

    # Advisory cost so XLA can overlap this tiny custom call with other work.
    sizes = (inputs,) + HIDDEN + (outputs,)
    flops = 2 * batch * sum(a * b for a, b in zip(sizes[:-1], sizes[1:]))
    param_bytes = sum(int(p.size) * p.dtype.itemsize for p in params)
    bytes_accessed = batch * (inputs + outputs) * 4 + param_bytes
    cost = pl.CostEstimate(flops=flops, transcendentals=0,
                           bytes_accessed=bytes_accessed)

    out = pl.pallas_call(
        _dqn_kernel,
        out_shape=jax.ShapeDtypeStruct((b_pad, outputs), jnp.float32),
        grid=grid,
        in_specs=in_specs,
        out_specs=out_spec,
        compiler_params=pltpu.CompilerParams(
            dimension_semantics=("parallel",)),   # 2 TCs on v7x; no-op v5e/v6e
        cost_estimate=cost,
    )(x, *params)

    return out[:batch]


def init_dqn_params(key, inputs, outputs):
    """Deterministic init matching the PyTorch module's __init__:
       weights ~ kaiming_normal_ (fan_in, ReLU gain => std = sqrt(2/fan_in)),
       biases  ~ U(-1/sqrt(fan_in), 1/sqrt(fan_in)) (nn.Linear default).
       Weights stored transposed [in, out]; biases stored (1, out)."""
    sizes = (inputs,) + HIDDEN + (outputs,)
    params = []
    for i in range(len(sizes) - 1):
        fan_in, fan_out = sizes[i], sizes[i + 1]
        key, kw, kb = jax.random.split(key, 3)
        std = (2.0 / fan_in) ** 0.5
        w = std * jax.random.normal(kw, (fan_in, fan_out), dtype=jnp.float32)
        bound = 1.0 / (fan_in ** 0.5)
        b = jax.random.uniform(kb, (1, fan_out), dtype=jnp.float32,
                               minval=-bound, maxval=bound)
        params.extend([w, b])
    return tuple(params)


def reference_forward(x, params):
    h = x
    for i in range(0, len(params) - 2, 2):
        h = jnp.maximum(h @ params[i] + params[i + 1], 0.0)
    return h @ params[-2] + params[-1]


if __name__ == "__main__":
    key = jax.random.PRNGKey(0)
    inputs, outputs = 32, 4

    key, kp = jax.random.split(key)
    params = init_dqn_params(kp, inputs, outputs)

    # Small batch (single grid step).
    key, kx = jax.random.split(key)
    x_small = jax.random.normal(kx, (8, inputs), dtype=jnp.float32)
    out_small = dqn_forward(x_small, params)
    jax.block_until_ready(out_small)
    ref_small = reference_forward(x_small, params)
    assert out_small.shape == (8, outputs)
    assert jnp.allclose(out_small, ref_small, atol=1e-4, rtol=1e-4), \
        "small-batch mismatch vs reference"

    # Larger, non-aligned batch: exercises padding + multi-step grid pipeline.
    key, kx = jax.random.split(key)
    x_big = jax.random.normal(kx, (1037, inputs), dtype=jnp.float32)
    out_big = dqn_forward(x_big, params)
    jax.block_until_ready(out_big)
    ref_big = reference_forward(x_big, params)
    assert out_big.shape == (1037, outputs)
    assert jnp.allclose(out_big, ref_big, atol=1e-4, rtol=1e-4), \
        "large-batch mismatch vs reference"

    print("KERNEL_OK")
</pallas_src>

<mosaic_0001>
module attributes {stable_mosaic.version = 11 : i64} {
  func.func @_dqn_kernel(%arg0: i32, %arg1: memref<8x32xf32, #tpu.memory_space<vmem>>, %arg2: memref<32x100xf32, #tpu.memory_space<vmem>>, %arg3: memref<1x100xf32, #tpu.memory_space<vmem>>, %arg4: memref<100x50xf32, #tpu.memory_space<vmem>>, %arg5: memref<1x50xf32, #tpu.memory_space<vmem>>, %arg6: memref<50x25xf32, #tpu.memory_space<vmem>>, %arg7: memref<1x25xf32, #tpu.memory_space<vmem>>, %arg8: memref<25x15xf32, #tpu.memory_space<vmem>>, %arg9: memref<1x15xf32, #tpu.memory_space<vmem>>, %arg10: memref<15x8xf32, #tpu.memory_space<vmem>>, %arg11: memref<1x8xf32, #tpu.memory_space<vmem>>, %arg12: memref<8x4xf32, #tpu.memory_space<vmem>>, %arg13: memref<1x4xf32, #tpu.memory_space<vmem>>, %arg14: memref<8x4xf32, #tpu.memory_space<vmem>>) attributes {dimension_semantics = [#tpu.dimension_semantics<parallel>], iteration_bounds = array<i64: 1>, scalar_prefetch = 0 : i64, scratch_operands = 0 : i64, tpu.core_type = #tpu.core_type<tc>, window_params = [{transform_indices = @transform_0, window_bounds = array<i64: 8, 32>}, {pipeline_mode = #tpu.pipeline_mode<synchronous>, transform_indices = @transform_1, window_bounds = array<i64: 32, 100>}, {pipeline_mode = #tpu.pipeline_mode<synchronous>, transform_indices = @transform_2, window_bounds = array<i64: 1, 100>}, {pipeline_mode = #tpu.pipeline_mode<synchronous>, transform_indices = @transform_3, window_bounds = array<i64: 100, 50>}, {pipeline_mode = #tpu.pipeline_mode<synchronous>, transform_indices = @transform_4, window_bounds = array<i64: 1, 50>}, {pipeline_mode = #tpu.pipeline_mode<synchronous>, transform_indices = @transform_5, window_bounds = array<i64: 50, 25>}, {pipeline_mode = #tpu.pipeline_mode<synchronous>, transform_indices = @transform_6, window_bounds = array<i64: 1, 25>}, {pipeline_mode = #tpu.pipeline_mode<synchronous>, transform_indices = @transform_7, window_bounds = array<i64: 25, 15>}, {pipeline_mode = #tpu.pipeline_mode<synchronous>, transform_indices = @transform_8, window_bounds = array<i64: 1, 15>}, {pipeline_mode = #tpu.pipeline_mode<synchronous>, transform_indices = @transform_9, window_bounds = array<i64: 15, 8>}, {pipeline_mode = #tpu.pipeline_mode<synchronous>, transform_indices = @transform_10, window_bounds = array<i64: 1, 8>}, {pipeline_mode = #tpu.pipeline_mode<synchronous>, transform_indices = @transform_11, window_bounds = array<i64: 8, 4>}, {pipeline_mode = #tpu.pipeline_mode<synchronous>, transform_indices = @transform_12, window_bounds = array<i64: 1, 4>}, {transform_indices = @transform_13, window_bounds = array<i64: 8, 4>}]} {
    %c0 = arith.constant 0 : index
    %c0_0 = arith.constant 0 : index
    %0 = vector.load %arg1[%c0, %c0_0] : memref<8x32xf32, #tpu.memory_space<vmem>>, vector<8x32xf32>
    %c0_1 = arith.constant 0 : index
    %c0_2 = arith.constant 0 : index
    %1 = vector.load %arg2[%c0_1, %c0_2] : memref<32x100xf32, #tpu.memory_space<vmem>>, vector<32x100xf32>
    %cst = arith.constant dense<0.000000e+00> : vector<8x100xf32>
    %2 = tpu.matmul %0, %1, %cst {dimension_numbers = #tpu.dot_dimension_numbers<[1], [0], [0], [1], [0, 0, 1, 1], [], []>} : vector<8x32xf32>, vector<32x100xf32>, vector<8x100xf32> -> vector<8x100xf32>
    %c0_3 = arith.constant 0 : index
    %c0_4 = arith.constant 0 : index
    %3 = vector.load %arg3[%c0_3, %c0_4] : memref<1x100xf32, #tpu.memory_space<vmem>>, vector<1x100xf32>
    %4 = vector.broadcast %3 : vector<1x100xf32> to vector<8x100xf32>
    %5 = arith.addf %2, %4 : vector<8x100xf32>
    %cst_5 = arith.constant 0.000000e+00 : f32
    %6 = vector.broadcast %cst_5 : f32 to vector<8x100xf32>
    %7 = arith.maximumf %5, %6 : vector<8x100xf32>
    %c0_6 = arith.constant 0 : index
    %c0_7 = arith.constant 0 : index
    %8 = vector.load %arg4[%c0_6, %c0_7] : memref<100x50xf32, #tpu.memory_space<vmem>>, vector<100x50xf32>
    %cst_8 = arith.constant dense<0.000000e+00> : vector<8x50xf32>
    %9 = tpu.matmul %7, %8, %cst_8 {dimension_numbers = #tpu.dot_dimension_numbers<[1], [0], [0], [1], [0, 0, 1, 1], [], []>} : vector<8x100xf32>, vector<100x50xf32>, vector<8x50xf32> -> vector<8x50xf32>
    %c0_9 = arith.constant 0 : index
    %c0_10 = arith.constant 0 : index
    %10 = vector.load %arg5[%c0_9, %c0_10] : memref<1x50xf32, #tpu.memory_space<vmem>>, vector<1x50xf32>
    %11 = vector.broadcast %10 : vector<1x50xf32> to vector<8x50xf32>
    %12 = arith.addf %9, %11 : vector<8x50xf32>
    %cst_11 = arith.constant 0.000000e+00 : f32
    %13 = vector.broadcast %cst_11 : f32 to vector<8x50xf32>
    %14 = arith.maximumf %12, %13 : vector<8x50xf32>
    %c0_12 = arith.constant 0 : index
    %c0_13 = arith.constant 0 : index
    %15 = vector.load %arg6[%c0_12, %c0_13] : memref<50x25xf32, #tpu.memory_space<vmem>>, vector<50x25xf32>
    %cst_14 = arith.constant dense<0.000000e+00> : vector<8x25xf32>
    %16 = tpu.matmul %14, %15, %cst_14 {dimension_numbers = #tpu.dot_dimension_numbers<[1], [0], [0], [1], [0, 0, 1, 1], [], []>} : vector<8x50xf32>, vector<50x25xf32>, vector<8x25xf32> -> vector<8x25xf32>
    %c0_15 = arith.constant 0 : index
    %c0_16 = arith.constant 0 : index
    %17 = vector.load %arg7[%c0_15, %c0_16] : memref<1x25xf32, #tpu.memory_space<vmem>>, vector<1x25xf32>
    %18 = vector.broadcast %17 : vector<1x25xf32> to vector<8x25xf32>
    %19 = arith.addf %16, %18 : vector<8x25xf32>
    %cst_17 = arith.constant 0.000000e+00 : f32
    %20 = vector.broadcast %cst_17 : f32 to vector<8x25xf32>
    %21 = arith.maximumf %19, %20 : vector<8x25xf32>
    %c0_18 = arith.constant 0 : index
    %c0_19 = arith.constant 0 : index
    %22 = vector.load %arg8[%c0_18, %c0_19] : memref<25x15xf32, #tpu.memory_space<vmem>>, vector<25x15xf32>
    %cst_20 = arith.constant dense<0.000000e+00> : vector<8x15xf32>
    %23 = tpu.matmul %21, %22, %cst_20 {dimension_numbers = #tpu.dot_dimension_numbers<[1], [0], [0], [1], [0, 0, 1, 1], [], []>} : vector<8x25xf32>, vector<25x15xf32>, vector<8x15xf32> -> vector<8x15xf32>
    %c0_21 = arith.constant 0 : index
    %c0_22 = arith.constant 0 : index
    %24 = vector.load %arg9[%c0_21, %c0_22] : memref<1x15xf32, #tpu.memory_space<vmem>>, vector<1x15xf32>
    %25 = vector.broadcast %24 : vector<1x15xf32> to vector<8x15xf32>
    %26 = arith.addf %23, %25 : vector<8x15xf32>
    %cst_23 = arith.constant 0.000000e+00 : f32
    %27 = vector.broadcast %cst_23 : f32 to vector<8x15xf32>
    %28 = arith.maximumf %26, %27 : vector<8x15xf32>
    %c0_24 = arith.constant 0 : index
    %c0_25 = arith.constant 0 : index
    %29 = vector.load %arg10[%c0_24, %c0_25] : memref<15x8xf32, #tpu.memory_space<vmem>>, vector<15x8xf32>
    %cst_26 = arith.constant dense<0.000000e+00> : vector<8x8xf32>
    %30 = tpu.matmul %28, %29, %cst_26 {dimension_numbers = #tpu.dot_dimension_numbers<[1], [0], [0], [1], [0, 0, 1, 1], [], []>} : vector<8x15xf32>, vector<15x8xf32>, vector<8x8xf32> -> vector<8x8xf32>
    %c0_27 = arith.constant 0 : index
    %c0_28 = arith.constant 0 : index
    %31 = vector.load %arg11[%c0_27, %c0_28] : memref<1x8xf32, #tpu.memory_space<vmem>>, vector<1x8xf32>
    %32 = vector.broadcast %31 : vector<1x8xf32> to vector<8x8xf32>
    %33 = arith.addf %30, %32 : vector<8x8xf32>
    %cst_29 = arith.constant 0.000000e+00 : f32
    %34 = vector.broadcast %cst_29 : f32 to vector<8x8xf32>
    %35 = arith.maximumf %33, %34 : vector<8x8xf32>
    %c0_30 = arith.constant 0 : index
    %c0_31 = arith.constant 0 : index
    %36 = vector.load %arg12[%c0_30, %c0_31] : memref<8x4xf32, #tpu.memory_space<vmem>>, vector<8x4xf32>
    %cst_32 = arith.constant dense<0.000000e+00> : vector<8x4xf32>
    %37 = tpu.matmul %35, %36, %cst_32 {dimension_numbers = #tpu.dot_dimension_numbers<[1], [0], [0], [1], [0, 0, 1, 1], [], []>} : vector<8x8xf32>, vector<8x4xf32>, vector<8x4xf32> -> vector<8x4xf32>
    %c0_33 = arith.constant 0 : index
    %c0_34 = arith.constant 0 : index
    %38 = vector.load %arg13[%c0_33, %c0_34] : memref<1x4xf32, #tpu.memory_space<vmem>>, vector<1x4xf32>
    %39 = vector.broadcast %38 : vector<1x4xf32> to vector<8x4xf32>
    %40 = arith.addf %37, %39 : vector<8x4xf32>
    %c0_35 = arith.constant 0 : index
    %c0_36 = arith.constant 0 : index
    %41 = vector.load %arg14[%c0_35, %c0_36] : memref<8x4xf32, #tpu.memory_space<vmem>>, vector<8x4xf32>
    tpu.vector_store %arg14[%c0_35, %c0_36], %40 {strides = array<i32>} : memref<8x4xf32, #tpu.memory_space<vmem>>, vector<8x4xf32>,
    return
  }
  func.func @transform_0(%arg0: i32) -> (i32, i32) {
    %c0_i32 = arith.constant 0 : i32
    %c0_i32_0 = arith.constant 0 : i32
    return %arg0, %c0_i32 : i32, i32
  }
  func.func @transform_1(%arg0: i32) -> (i32, i32) {
    %c0_i32 = arith.constant 0 : i32
    %c0_i32_0 = arith.constant 0 : i32
    %c0_i32_1 = arith.constant 0 : i32
    return %c0_i32, %c0_i32_0 : i32, i32
  }
  func.func @transform_2(%arg0: i32) -> (i32, i32) {
    %c0_i32 = arith.constant 0 : i32
    %c0_i32_0 = arith.constant 0 : i32
    %c0_i32_1 = arith.constant 0 : i32
    return %c0_i32, %c0_i32_0 : i32, i32
  }
  func.func @transform_3(%arg0: i32) -> (i32, i32) {
    %c0_i32 = arith.constant 0 : i32
    %c0_i32_0 = arith.constant 0 : i32
    %c0_i32_1 = arith.constant 0 : i32
    return %c0_i32, %c0_i32_0 : i32, i32
  }
  func.func @transform_4(%arg0: i32) -> (i32, i32) {
    %c0_i32 = arith.constant 0 : i32
    %c0_i32_0 = arith.constant 0 : i32
    %c0_i32_1 = arith.constant 0 : i32
    return %c0_i32, %c0_i32_0 : i32, i32
  }
  func.func @transform_5(%arg0: i32) -> (i32, i32) {
    %c0_i32 = arith.constant 0 : i32
    %c0_i32_0 = arith.constant 0 : i32
    %c0_i32_1 = arith.constant 0 : i32
    return %c0_i32, %c0_i32_0 : i32, i32
  }
  func.func @transform_6(%arg0: i32) -> (i32, i32) {
    %c0_i32 = arith.constant 0 : i32
    %c0_i32_0 = arith.constant 0 : i32
    %c0_i32_1 = arith.constant 0 : i32
    return %c0_i32, %c0_i32_0 : i32, i32
  }
  func.func @transform_7(%arg0: i32) -> (i32, i32) {
    %c0_i32 = arith.constant 0 : i32
    %c0_i32_0 = arith.constant 0 : i32
    %c0_i32_1 = arith.constant 0 : i32
    return %c0_i32, %c0_i32_0 : i32, i32
  }
  func.func @transform_8(%arg0: i32) -> (i32, i32) {
    %c0_i32 = arith.constant 0 : i32
    %c0_i32_0 = arith.constant 0 : i32
    %c0_i32_1 = arith.constant 0 : i32
    return %c0_i32, %c0_i32_0 : i32, i32
  }
  func.func @transform_9(%arg0: i32) -> (i32, i32) {
    %c0_i32 = arith.constant 0 : i32
    %c0_i32_0 = arith.constant 0 : i32
    %c0_i32_1 = arith.constant 0 : i32
    return %c0_i32, %c0_i32_0 : i32, i32
  }
  func.func @transform_10(%arg0: i32) -> (i32, i32) {
    %c0_i32 = arith.constant 0 : i32
    %c0_i32_0 = arith.constant 0 : i32
    %c0_i32_1 = arith.constant 0 : i32
    return %c0_i32, %c0_i32_0 : i32, i32
  }
  func.func @transform_11(%arg0: i32) -> (i32, i32) {
    %c0_i32 = arith.constant 0 : i32
    %c0_i32_0 = arith.constant 0 : i32
    %c0_i32_1 = arith.constant 0 : i32
    return %c0_i32, %c0_i32_0 : i32, i32
  }
  func.func @transform_12(%arg0: i32) -> (i32, i32) {
    %c0_i32 = arith.constant 0 : i32
    %c0_i32_0 = arith.constant 0 : i32
    %c0_i32_1 = arith.constant 0 : i32
    return %c0_i32, %c0_i32_0 : i32, i32
  }
  func.func @transform_13(%arg0: i32) -> (i32, i32) {
    %c0_i32 = arith.constant 0 : i32
    %c0_i32_0 = arith.constant 0 : i32
    return %arg0, %c0_i32 : i32, i32
  }
}

</mosaic_0001>

<llo_original>
// kernel: dqn_forward.1
$region0: #{dqn_forward.1}
  #allocation0 [shape = 'u32[]', space=smem, size = 0x4, offset = 0x4, fixed_abs, tag = 'smem constant byte address 0x4 - core index']
  #allocation1 [shape = 'u32[72,128]{1,0:T(1,128)}', space=vmem, size = 0x9000, scoped, tag = 'internal scratch']
  %s0 = inlined_call_operand.vmem [shape: f32[8,32], index: 0, kind: input, shape index: {}]
  %s1 = inlined_call_operand.vmem [shape: f32[32,100], index: 1, kind: input, shape index: {}]
  %s2 = inlined_call_operand.vmem [shape: f32[1,100], index: 2, kind: input, shape index: {}]
  %s3 = inlined_call_operand.vmem [shape: f32[100,50], index: 3, kind: input, shape index: {}]
  %s4 = inlined_call_operand.vmem [shape: f32[1,50], index: 4, kind: input, shape index: {}]
  %s5 = inlined_call_operand.vmem [shape: f32[50,25], index: 5, kind: input, shape index: {}]
  %s6 = inlined_call_operand.vmem [shape: f32[1,25], index: 6, kind: input, shape index: {}]
  %s7 = inlined_call_operand.vmem [shape: f32[25,15], index: 7, kind: input, shape index: {}]
  %s8 = inlined_call_operand.vmem [shape: f32[1,15], index: 8, kind: input, shape index: {}]
  %s9 = inlined_call_operand.vmem [shape: f32[15,8], index: 9, kind: input, shape index: {}]
  %s10 = inlined_call_operand.vmem [shape: f32[1,8], index: 10, kind: input, shape index: {}]
  %s11 = inlined_call_operand.vmem [shape: f32[8,4], index: 11, kind: input, shape index: {}]
  %s12 = inlined_call_operand.vmem [shape: f32[1,4], index: 12, kind: input, shape index: {}]
  %s13 = inlined_call_operand.vmem [shape: f32[8,4], index: 13, kind: output, shape index: {}]
  %s14 = sld [smem:[#allocation0]]
  $region62: #{dqn_forward.1} parent=0
    _
  %s16 = ssub.s32 1, %s14
  %s17 = scalar_select 0, %s16, %s14
  // Predicated region
  $region2: #{dqn_forward.1} parent=0 // pred_check
    _
  $region3: #{dqn_forward.1} parent=0 // pred_check_branch
    %19 = sbr.rel (0) target = $region5
  $region4: #{dqn_forward.1} parent=0 // pred_region
    _
  $region5: #{dqn_forward.1} parent=0 // pred_fallthru
    _
  // Predicated region
  $region6: #{dqn_forward.1} parent=0 // pred_check
    _
  $region7: #{dqn_forward.1} parent=0 // pred_check_branch
    %21 = sbr.rel (0) target = $region9
  $region8: #{dqn_forward.1} parent=0 // pred_region
    _
  $region9: #{dqn_forward.1} parent=0 // pred_fallthru
    _
  // Predicated region
  $region10: #{dqn_forward.1} parent=0 // pred_check
    _
  $region11: #{dqn_forward.1} parent=0 // pred_check_branch
    %23 = sbr.rel (0) target = $region13
  $region12: #{dqn_forward.1} parent=0 // pred_region
    _
  $region13: #{dqn_forward.1} parent=0 // pred_fallthru
    _
  // Predicated region
  $region14: #{dqn_forward.1} parent=0 // pred_check
    _
  $region15: #{dqn_forward.1} parent=0 // pred_check_branch
    %25 = sbr.rel (0) target = $region17
  $region16: #{dqn_forward.1} parent=0 // pred_region
    _
  $region17: #{dqn_forward.1} parent=0 // pred_fallthru
    _
  // Predicated region
  $region18: #{dqn_forward.1} parent=0 // pred_check
    _
  $region19: #{dqn_forward.1} parent=0 // pred_check_branch
    %27 = sbr.rel (0) target = $region21
  $region20: #{dqn_forward.1} parent=0 // pred_region
    _
  $region21: #{dqn_forward.1} parent=0 // pred_fallthru
    _
  // Predicated region
  $region22: #{dqn_forward.1} parent=0 // pred_check
    _
  $region23: #{dqn_forward.1} parent=0 // pred_check_branch
    %29 = sbr.rel (0) target = $region25
  $region24: #{dqn_forward.1} parent=0 // pred_region
    _
  $region25: #{dqn_forward.1} parent=0 // pred_fallthru
    _
  // Predicated region
  $region26: #{dqn_forward.1} parent=0 // pred_check
    _
  $region27: #{dqn_forward.1} parent=0 // pred_check_branch
    %31 = sbr.rel (0) target = $region29
  $region28: #{dqn_forward.1} parent=0 // pred_region
    _
  $region29: #{dqn_forward.1} parent=0 // pred_fallthru
    _
  // Predicated region
  $region30: #{dqn_forward.1} parent=0 // pred_check
    _
  $region31: #{dqn_forward.1} parent=0 // pred_check_branch
    %33 = sbr.rel (0) target = $region33
  $region32: #{dqn_forward.1} parent=0 // pred_region
    _
  $region33: #{dqn_forward.1} parent=0 // pred_fallthru
    _
  // Predicated region
  $region34: #{dqn_forward.1} parent=0 // pred_check
    _
  $region35: #{dqn_forward.1} parent=0 // pred_check_branch
    %35 = sbr.rel (0) target = $region37
  $region36: #{dqn_forward.1} parent=0 // pred_region
    _
  $region37: #{dqn_forward.1} parent=0 // pred_fallthru
    _
  // Predicated region
  $region38: #{dqn_forward.1} parent=0 // pred_check
    _
  $region39: #{dqn_forward.1} parent=0 // pred_check_branch
    %37 = sbr.rel (0) target = $region41
  $region40: #{dqn_forward.1} parent=0 // pred_region
    _
  $region41: #{dqn_forward.1} parent=0 // pred_fallthru
    _
  // Predicated region
  $region42: #{dqn_forward.1} parent=0 // pred_check
    _
  $region43: #{dqn_forward.1} parent=0 // pred_check_branch
    %39 = sbr.rel (0) target = $region45
  $region44: #{dqn_forward.1} parent=0 // pred_region
    _
  $region45: #{dqn_forward.1} parent=0 // pred_fallthru
    _
  // Predicated region
  $region46: #{dqn_forward.1} parent=0 // pred_check
    _
  $region47: #{dqn_forward.1} parent=0 // pred_check_branch
    %41 = sbr.rel (0) target = $region49
  $region48: #{dqn_forward.1} parent=0 // pred_region
    _
  $region49: #{dqn_forward.1} parent=0 // pred_fallthru
    _
  // Predicated region
  $region50: #{dqn_forward.1} parent=0 // pred_check
    _
  $region51: #{dqn_forward.1} parent=0 // pred_check_branch
    %43 = sbr.rel (0) target = $region53
  $region52: #{dqn_forward.1} parent=0 // pred_region
    _
  $region53: #{dqn_forward.1} parent=0 // pred_fallthru
    _
  %v44 = vld [vmem:[%s0] sm:$0xff]
  %v45 = vld [vmem:[%s1] sm:$0xff]
  %v46 = vld [vmem:[%s1 + $0x8] sm:$0xff]
  %v47 = vld [vmem:[%s1 + $0x10] sm:$0xff]
  %v48 = vld [vmem:[%s1 + $0x18] sm:$0xff]
  %v49 = vld [vmem:[%s2] sm:$0x1]
  %v51 = vperm.slane %v49, 0
  %vm53 = vcmask 261120
  %v55 = vsel %vm53, %v44, 0
  %57 = vmatpush.msra.mxu0 0.0
  %58 = vmatpush.msra.mxu0 0.0
  %59 = vmatpush.msra.mxu0 0.0
  %60 = vmatpush.msra.mxu0 0.0
  %61 = vmatpush.msra.mxu0 0.0
  %62 = vmatpush.msra.mxu0 0.0
  %63 = vmatpush.msra.mxu0 0.0
  %64 = vmatpush.msra.mxu0 0.0
  %65 = vmatpush.msra.mxu0 0.0
  %66 = vmatpush.msra.mxu0 0.0
  %67 = vmatpush.msra.mxu0 0.0
  %68 = vmatpush.msra.mxu0 0.0
  %69 = vmatpush.msra.mxu0 %v48
  %70 = vmatpush.msra.mxu0 %v47
  %71 = vmatpush.msra.mxu0 %v46
  %72 = vmatpush.msra.mxu0 %v45
  %73 = vmatmul.f32.gmra.mxu0 %v55
  %v74 = vpop.f32.mrf.mxu0
  %v75 = vadd.f32 %v51, %v74
  %76 = vdwg.mxu0
  %v77 = vmax.f32 %v75, 0.0
  %v78 = vld [vmem:[%s3] sm:$0xff]
  %v79 = vld [vmem:[%s3 + $0x8] sm:$0xff]
  %v80 = vld [vmem:[%s3 + $0x10] sm:$0xff]
  %v81 = vld [vmem:[%s3 + $0x18] sm:$0xff]
  %v82 = vld [vmem:[%s3 + $0x20] sm:$0xff]
  %v83 = vld [vmem:[%s3 + $0x28] sm:$0xff]
  %v84 = vld [vmem:[%s3 + $0x30] sm:$0xff]
  %v85 = vld [vmem:[%s3 + $0x38] sm:$0xff]
  %v86 = vld [vmem:[%s3 + $0x40] sm:$0xff]
  %v87 = vld [vmem:[%s3 + $0x48] sm:$0xff]
  %v88 = vld [vmem:[%s3 + $0x50] sm:$0xff]
  %v89 = vld [vmem:[%s3 + $0x58] sm:$0xff]
  %v90 = vld [vmem:[%s3 + $0x60] sm:$0xf]
  %v91 = vld [vmem:[%s4] sm:$0x1]
  %v93 = vperm.slane %v91, 0
  %vm95 = vcmask 818176
  %v97 = vsel %vm95, %v77, 0
  %vm99 = vcmask 1043456
  %v101 = vsel %vm99, %v90, 0
  %103 = vmatpush.msra.mxu0 0.0
  %104 = vmatpush.msra.mxu0 0.0
  %105 = vmatpush.msra.mxu0 0.0
  %106 = vmatpush.msra.mxu0 %v101
  %107 = vmatpush.msra.mxu0 %v89
  %108 = vmatpush.msra.mxu0 %v88
  %109 = vmatpush.msra.mxu0 %v87
  %110 = vmatpush.msra.mxu0 %v86
  %111 = vmatpush.msra.mxu0 %v85
  %112 = vmatpush.msra.mxu0 %v84
  %113 = vmatpush.msra.mxu0 %v83
  %114 = vmatpush.msra.mxu0 %v82
  %115 = vmatpush.msra.mxu0 %v81
  %116 = vmatpush.msra.mxu0 %v80
  %117 = vmatpush.msra.mxu0 %v79
  %118 = vmatpush.msra.mxu0 %v78
  %119 = vmatmul.f32.gmra.mxu0 %v97
  %v120 = vpop.f32.mrf.mxu0
  %v121 = vadd.f32 %v93, %v120
  %122 = vdwg.mxu0
  %v123 = vmax.f32 %v121, 0.0
  %v124 = vld [vmem:[%s5] sm:$0xff]
  %v125 = vld [vmem:[%s5 + $0x8] sm:$0xff]
  %v126 = vld [vmem:[%s5 + $0x10] sm:$0xff]
  %v127 = vld [vmem:[%s5 + $0x18] sm:$0xff]
  %v128 = vld [vmem:[%s5 + $0x20] sm:$0xff]
  %v129 = vld [vmem:[%s5 + $0x28] sm:$0xff]
  %v130 = vld [vmem:[%s5 + $0x30] sm:$0x3]
  %v131 = vld [vmem:[%s6] sm:$0x1]
  %v133 = vperm.slane %v131, 0
  %vm135 = vcmask 408576
  %v137 = vsel %vm135, %v123, 0
  %vm139 = vcmask 1041408
  %v141 = vsel %vm139, %v130, 0
  %143 = vmatpush.msra.mxu0 0.0
  %144 = vmatpush.msra.mxu0 0.0
  %145 = vmatpush.msra.mxu0 0.0
  %146 = vmatpush.msra.mxu0 0.0
  %147 = vmatpush.msra.mxu0 0.0
  %148 = vmatpush.msra.mxu0 0.0
  %149 = vmatpush.msra.mxu0 0.0
  %150 = vmatpush.msra.mxu0 0.0
  %151 = vmatpush.msra.mxu0 0.0
  %152 = vmatpush.msra.mxu0 %v141
  %153 = vmatpush.msra.mxu0 %v129
  %154 = vmatpush.msra.mxu0 %v128
  %155 = vmatpush.msra.mxu0 %v127
  %156 = vmatpush.msra.mxu0 %v126
  %157 = vmatpush.msra.mxu0 %v125
  %158 = vmatpush.msra.mxu0 %v124
  %159 = vmatmul.f32.gmra.mxu0 %v137
  %v160 = vpop.f32.mrf.mxu0
  %v161 = vadd.f32 %v133, %v160
  %162 = vdwg.mxu0
  %v163 = vmax.f32 %v161, 0.0
  %v164 = vld [vmem:[%s7] sm:$0xff]
  %v165 = vld [vmem:[%s7 + $0x8] sm:$0xff]
  %v166 = vld [vmem:[%s7 + $0x10] sm:$0xff]
  %v167 = vld [vmem:[%s7 + $0x18] sm:$0x1]
  %v168 = vld [vmem:[%s8] sm:$0x1]
  %v170 = vperm.slane %v168, 0
  %vm172 = vcmask 203776
  %v174 = vsel %vm172, %v163, 0
  %vm176 = vcmask 1040384
  %v178 = vsel %vm176, %v167, 0
  %180 = vmatpush.msra.mxu0 0.0
  %181 = vmatpush.msra.mxu0 0.0
  %182 = vmatpush.msra.mxu0 0.0
  %183 = vmatpush.msra.mxu0 0.0
  %184 = vmatpush.msra.mxu0 0.0
  %185 = vmatpush.msra.mxu0 0.0
  %186 = vmatpush.msra.mxu0 0.0
  %187 = vmatpush.msra.mxu0 0.0
  %188 = vmatpush.msra.mxu0 0.0
  %189 = vmatpush.msra.mxu0 0.0
  %190 = vmatpush.msra.mxu0 0.0
  %191 = vmatpush.msra.mxu0 0.0
  %192 = vmatpush.msra.mxu0 %v178
  %193 = vmatpush.msra.mxu0 %v166
  %194 = vmatpush.msra.mxu0 %v165
  %195 = vmatpush.msra.mxu0 %v164
  %196 = vmatmul.f32.gmra.mxu0 %v174
  %v197 = vpop.f32.mrf.mxu0
  %v198 = vadd.f32 %v170, %v197
  %199 = vdwg.mxu0
  %v200 = vmax.f32 %v198, 0.0
  %v201 = vld [vmem:[%s9] sm:$0xff]
  %v202 = vld [vmem:[%s9 + $0x8] sm:$0x7f]
  %v203 = vld [vmem:[%s10] sm:$0x1]
  %v205 = vperm.slane %v203, 0
  %vm207 = vcmask 121856
  %v209 = vsel %vm207, %v200, 0
  %vm211 = vcmask 1046528
  %v213 = vsel %vm211, %v202, 0
  %215 = vmatpush.msra.mxu0 0.0
  %216 = vmatpush.msra.mxu0 0.0
  %217 = vmatpush.msra.mxu0 0.0
  %218 = vmatpush.msra.mxu0 0.0
  %219 = vmatpush.msra.mxu0 0.0
  %220 = vmatpush.msra.mxu0 0.0
  %221 = vmatpush.msra.mxu0 0.0
  %222 = vmatpush.msra.mxu0 0.0
  %223 = vmatpush.msra.mxu0 0.0
  %224 = vmatpush.msra.mxu0 0.0
  %225 = vmatpush.msra.mxu0 0.0
  %226 = vmatpush.msra.mxu0 0.0
  %227 = vmatpush.msra.mxu0 0.0
  %228 = vmatpush.msra.mxu0 0.0
  %229 = vmatpush.msra.mxu0 %v213
  %230 = vmatpush.msra.mxu0 %v201
  %231 = vmatmul.f32.gmra.mxu0 %v209
  %v232 = vpop.f32.mrf.mxu0
  %v233 = vadd.f32 %v205, %v232
  %234 = vdwg.mxu0
  %v235 = vmax.f32 %v233, 0.0
  %v236 = vld [vmem:[%s11] sm:$0xff]
  %v237 = vld [vmem:[%s12] sm:$0x1]
  %v239 = vperm.slane %v237, 0
  %vm241 = vcmask 64512
  %v243 = vsel %vm241, %v235, 0
  %245 = vmatpush.msra.mxu0 0.0
  %246 = vmatpush.msra.mxu0 0.0
  %247 = vmatpush.msra.mxu0 0.0
  %248 = vmatpush.msra.mxu0 0.0
  %249 = vmatpush.msra.mxu0 0.0
  %250 = vmatpush.msra.mxu0 0.0
  %251 = vmatpush.msra.mxu0 0.0
  %252 = vmatpush.msra.mxu0 0.0
  %253 = vmatpush.msra.mxu0 0.0
  %254 = vmatpush.msra.mxu0 0.0
  %255 = vmatpush.msra.mxu0 0.0
  %256 = vmatpush.msra.mxu0 0.0
  %257 = vmatpush.msra.mxu0 0.0
  %258 = vmatpush.msra.mxu0 0.0
  %259 = vmatpush.msra.mxu0 0.0
  %260 = vmatpush.msra.mxu0 %v236
  %261 = vmatmul.f32.gmra.mxu0 %v243
  %v262 = vpop.f32.mrf.mxu0
  %v263 = vadd.f32 %v239, %v262
  %264 = vdwg.mxu0
  %vm265 = vcmask 31744
  %266 = vst.msk [vmem:[%s13] sm:$0xff] %vm265, %v263
  // Predicated region
  $region54: #{dqn_forward.1} parent=0 // pred_check
    _
  $region55: #{dqn_forward.1} parent=0 // pred_check_branch
    %268 = sbr.rel (0) target = $region57
  $region56: #{dqn_forward.1} parent=0 // pred_region
    _
  $region57: #{dqn_forward.1} parent=0 // pred_fallthru
    _
  // Predicated region
  $region58: #{dqn_forward.1} parent=0 // pred_check
    _
  $region59: #{dqn_forward.1} parent=0 // pred_check_branch
    %270 = sbr.rel (0) target = $region61
  $region60: #{dqn_forward.1} parent=0 // pred_region
    _
  $region61: #{dqn_forward.1} parent=0 // pred_fallthru
    _

</llo_original>
